<compile_context>
chip_gen: v5e
topology: v5e:2x2
jax: 0.10.0
libtpu: 0.0.40
codegen_flags: <defaults>
</compile_context>

<pallas_src>
import functools

import jax
import jax.numpy as jnp
from jax.experimental import pallas as pl
from jax.experimental.pallas import tpu as pltpu


def _policy_kernel(min_std, max_std, action_dim,
                   x_ref, w1_ref, b1_ref, w2_ref, b2_ref, wh_ref, bh_ref,
                   out_ref):
    """Fused MLP + fused (mean|log_std) head for one batch tile."""
    # Layer 1: Linear (bf16 MXU, f32 acc) + bias + ReLU (f32 VPU)
    h1 = jnp.dot(x_ref[...], w1_ref[...], preferred_element_type=jnp.float32)
    h1 = jnp.maximum(h1 + b1_ref[...], 0.0)

    # Layer 2: Linear + bias + ReLU
    h2 = jnp.dot(h1.astype(w2_ref.dtype), w2_ref[...],
                 preferred_element_type=jnp.float32)
    h2 = jnp.maximum(h2 + b2_ref[...], 0.0)

    # Fused heads: columns [0, A) are the mean head, [A, 2A) the log_std head.
    heads = jnp.dot(h2.astype(wh_ref.dtype), wh_ref[...],
                    preferred_element_type=jnp.float32) + bh_ref[...]

    col = jax.lax.broadcasted_iota(jnp.int32, heads.shape, 1)
    mean_part = jnp.tanh(heads)
    std_part = jnp.clip(jnp.exp(heads), min_std, max_std)
    out_ref[...] = jnp.where(col < action_dim, mean_part, std_part)


def ordering_policy_forward(x, params, *, min_std=0.1, max_std=0.5,
                            block_batch=512, compute_dtype=jnp.bfloat16):
    """Returns (mean, std) of the Gaussian policy, as in OrderingPolicy.forward."""
    B, D = x.shape
    H = params["w1"].shape[1]
    A = params["wh"].shape[1] // 2

    # Batch tile: multiple of 8 sublanes; shrink for small batches.
    tb = min(block_batch, max(8, ((B + 7) // 8) * 8))
    tb = ((tb + 7) // 8) * 8
    b_pad = ((B + tb - 1) // tb) * tb

    xp = x.astype(compute_dtype)
    if b_pad != B:
        xp = jnp.pad(xp, ((0, b_pad - B), (0, 0)))

    w1 = params["w1"].astype(compute_dtype)
    w2 = params["w2"].astype(compute_dtype)
    wh = params["wh"].astype(compute_dtype)
    b1 = params["b1"].astype(jnp.float32)
    b2 = params["b2"].astype(jnp.float32)
    bh = params["bh"].astype(jnp.float32)

    kernel = functools.partial(_policy_kernel, float(min_std), float(max_std), A)
    const = lambda i: (0, 0)   # weights/biases: resident, fetched once

    out = pl.pallas_call(
        kernel,
        out_shape=jax.ShapeDtypeStruct((b_pad, 2 * A), jnp.float32),
        grid=(b_pad // tb,),
        in_specs=[
            pl.BlockSpec((tb, D), lambda i: (i, 0)),     # x tile, streamed
            pl.BlockSpec((D, H), const),                 # w1
            pl.BlockSpec((1, H), const),                 # b1
            pl.BlockSpec((H, H), const),                 # w2
            pl.BlockSpec((1, H), const),                 # b2
            pl.BlockSpec((H, 2 * A), const),             # fused head weight
            pl.BlockSpec((1, 2 * A), const),             # fused head bias
        ],
        out_specs=pl.BlockSpec((tb, 2 * A), lambda i: (i, 0)),
        compiler_params=pltpu.CompilerParams(
            dimension_semantics=("parallel",),
        ),
    )(xp, w1, b1, w2, b2, wh, bh)

    mean = out[:B, :A]
    std = out[:B, A:]
    return mean, std


def _orthogonal(key, out_dim, in_dim, gain):
    """Deterministic orthogonal init (PyTorch-style: weight shape [out, in])."""
    init = jax.nn.initializers.orthogonal(scale=gain)
    return init(key, (out_dim, in_dim), jnp.float32)


def make_params(input_dim, hidden_dim, action_dim, seed=0):
    keys = jax.random.split(jax.random.PRNGKey(seed), 4)
    # PyTorch Linear stores W as [out, in] and computes x @ W.T.
    # We pre-transpose to [in, out] so the kernel does plain x @ W.
    w1 = _orthogonal(keys[0], hidden_dim, input_dim, gain=0.5).T
    w2 = _orthogonal(keys[1], hidden_dim, hidden_dim, gain=0.5).T
    wm = _orthogonal(keys[2], action_dim, hidden_dim, gain=0.01).T
    ws = _orthogonal(keys[3], action_dim, hidden_dim, gain=0.01).T
    # Fuse the two heads: weight [hidden, 2*A], bias [1, 2*A] (mean bias 0,
    # log_std bias -1.0 as in the PyTorch init).
    wh = jnp.concatenate([wm, ws], axis=1)
    bh = jnp.concatenate(
        [jnp.zeros((1, action_dim), jnp.float32),
         jnp.full((1, action_dim), -1.0, jnp.float32)], axis=1)
    return {
        "w1": w1, "b1": jnp.zeros((1, hidden_dim), jnp.float32),
        "w2": w2, "b2": jnp.zeros((1, hidden_dim), jnp.float32),
        "wh": wh, "bh": bh,
    }


def _reference_forward(x, params, min_std=0.1, max_std=0.5):
    A = params["wh"].shape[1] // 2
    h1 = jnp.maximum(x @ params["w1"] + params["b1"], 0.0)
    h2 = jnp.maximum(h1 @ params["w2"] + params["b2"], 0.0)
    heads = h2 @ params["wh"] + params["bh"]
    mean = jnp.tanh(heads[:, :A])
    std = jnp.clip(jnp.exp(heads[:, A:]), min_std, max_std)
    return mean, std


if __name__ == "__main__":
    input_dim, hidden_dim, action_dim = 16, 32, 4
    params = make_params(input_dim, hidden_dim, action_dim, seed=0)

    # Case 1: tiny batch (single grid step).
    key = jax.random.PRNGKey(0)
    x = jax.random.normal(key, (8, input_dim), dtype=jnp.float32)
    mean, std = ordering_policy_forward(x, params, min_std=0.1, max_std=0.5)
    jax.block_until_ready((mean, std))

    mean_ref, std_ref = _reference_forward(x, params)
    assert jnp.allclose(mean, mean_ref, atol=2e-3), "mean mismatch"
    assert jnp.allclose(std, std_ref, atol=2e-3), "std mismatch"

    # Case 2: uneven batch with multiple grid steps (exercises tiling/padding).
    x2 = jax.random.normal(jax.random.PRNGKey(1), (37, input_dim), dtype=jnp.float32)
    mean2, std2 = ordering_policy_forward(x2, params, block_batch=8)
    jax.block_until_ready((mean2, std2))

    mean2_ref, std2_ref = _reference_forward(x2, params)
    assert mean2.shape == (37, action_dim) and std2.shape == (37, action_dim)
    assert jnp.allclose(mean2, mean2_ref, atol=2e-3), "mean mismatch (tiled)"
    assert jnp.allclose(std2, std2_ref, atol=2e-3), "std mismatch (tiled)"
    assert bool(jnp.all(std2 >= 0.1)) and bool(jnp.all(std2 <= 0.5)), "std clamp violated"

    print("KERNEL_OK")
</pallas_src>

<mosaic_0001>
module attributes {stable_mosaic.version = 11 : i64} {
  func.func @_policy_kernel(%arg0: i32, %arg1: memref<8x16xbf16, #tpu.memory_space<vmem>>, %arg2: memref<16x32xbf16, #tpu.memory_space<vmem>>, %arg3: memref<1x32xf32, #tpu.memory_space<vmem>>, %arg4: memref<32x32xbf16, #tpu.memory_space<vmem>>, %arg5: memref<1x32xf32, #tpu.memory_space<vmem>>, %arg6: memref<32x8xbf16, #tpu.memory_space<vmem>>, %arg7: memref<1x8xf32, #tpu.memory_space<vmem>>, %arg8: memref<8x8xf32, #tpu.memory_space<vmem>>) attributes {dimension_semantics = [#tpu.dimension_semantics<parallel>], iteration_bounds = array<i64: 1>, scalar_prefetch = 0 : i64, scratch_operands = 0 : i64, tpu.core_type = #tpu.core_type<tc>, window_params = [{transform_indices = @transform_0, window_bounds = array<i64: 8, 16>}, {pipeline_mode = #tpu.pipeline_mode<synchronous>, transform_indices = @transform_1, window_bounds = array<i64: 16, 32>}, {pipeline_mode = #tpu.pipeline_mode<synchronous>, transform_indices = @transform_2, window_bounds = array<i64: 1, 32>}, {pipeline_mode = #tpu.pipeline_mode<synchronous>, transform_indices = @transform_3, window_bounds = array<i64: 32, 32>}, {pipeline_mode = #tpu.pipeline_mode<synchronous>, transform_indices = @transform_4, window_bounds = array<i64: 1, 32>}, {pipeline_mode = #tpu.pipeline_mode<synchronous>, transform_indices = @transform_5, window_bounds = array<i64: 32, 8>}, {pipeline_mode = #tpu.pipeline_mode<synchronous>, transform_indices = @transform_6, window_bounds = array<i64: 1, 8>}, {transform_indices = @transform_7, window_bounds = array<i64: 8, 8>}]} {
    %c0 = arith.constant 0 : index
    %c0_0 = arith.constant 0 : index
    %0 = vector.load %arg1[%c0, %c0_0] : memref<8x16xbf16, #tpu.memory_space<vmem>>, vector<8x16xbf16>
    %c0_1 = arith.constant 0 : index
    %c0_2 = arith.constant 0 : index
    %1 = vector.load %arg2[%c0_1, %c0_2] : memref<16x32xbf16, #tpu.memory_space<vmem>>, vector<16x32xbf16>
    %cst = arith.constant dense<0.000000e+00> : vector<8x32xf32>
    %2 = tpu.matmul %0, %1, %cst {dimension_numbers = #tpu.dot_dimension_numbers<[1], [0], [0], [1], [0, 0, 1, 1], [], []>} : vector<8x16xbf16>, vector<16x32xbf16>, vector<8x32xf32> -> vector<8x32xf32>
    %c0_3 = arith.constant 0 : index
    %c0_4 = arith.constant 0 : index
    %3 = vector.load %arg3[%c0_3, %c0_4] : memref<1x32xf32, #tpu.memory_space<vmem>>, vector<1x32xf32>
    %4 = vector.broadcast %3 : vector<1x32xf32> to vector<8x32xf32>
    %5 = arith.addf %2, %4 : vector<8x32xf32>
    %cst_5 = arith.constant 0.000000e+00 : f32
    %6 = vector.broadcast %cst_5 : f32 to vector<8x32xf32>
    %7 = arith.maximumf %5, %6 : vector<8x32xf32>
    %8 = arith.truncf %7 : vector<8x32xf32> to vector<8x32xbf16>
    %c0_6 = arith.constant 0 : index
    %c0_7 = arith.constant 0 : index
    %9 = vector.load %arg4[%c0_6, %c0_7] : memref<32x32xbf16, #tpu.memory_space<vmem>>, vector<32x32xbf16>
    %cst_8 = arith.constant dense<0.000000e+00> : vector<8x32xf32>
    %10 = tpu.matmul %8, %9, %cst_8 {dimension_numbers = #tpu.dot_dimension_numbers<[1], [0], [0], [1], [0, 0, 1, 1], [], []>} : vector<8x32xbf16>, vector<32x32xbf16>, vector<8x32xf32> -> vector<8x32xf32>
    %c0_9 = arith.constant 0 : index
    %c0_10 = arith.constant 0 : index
    %11 = vector.load %arg5[%c0_9, %c0_10] : memref<1x32xf32, #tpu.memory_space<vmem>>, vector<1x32xf32>
    %12 = vector.broadcast %11 : vector<1x32xf32> to vector<8x32xf32>
    %13 = arith.addf %10, %12 : vector<8x32xf32>
    %cst_11 = arith.constant 0.000000e+00 : f32
    %14 = vector.broadcast %cst_11 : f32 to vector<8x32xf32>
    %15 = arith.maximumf %13, %14 : vector<8x32xf32>
    %16 = arith.truncf %15 : vector<8x32xf32> to vector<8x32xbf16>
    %c0_12 = arith.constant 0 : index
    %c0_13 = arith.constant 0 : index
    %17 = vector.load %arg6[%c0_12, %c0_13] : memref<32x8xbf16, #tpu.memory_space<vmem>>, vector<32x8xbf16>
    %cst_14 = arith.constant dense<0.000000e+00> : vector<8x8xf32>
    %18 = tpu.matmul %16, %17, %cst_14 {dimension_numbers = #tpu.dot_dimension_numbers<[1], [0], [0], [1], [0, 0, 1, 1], [], []>} : vector<8x32xbf16>, vector<32x8xbf16>, vector<8x8xf32> -> vector<8x8xf32>
    %c0_15 = arith.constant 0 : index
    %c0_16 = arith.constant 0 : index
    %19 = vector.load %arg7[%c0_15, %c0_16] : memref<1x8xf32, #tpu.memory_space<vmem>>, vector<1x8xf32>
    %20 = vector.broadcast %19 : vector<1x8xf32> to vector<8x8xf32>
    %21 = arith.addf %18, %20 : vector<8x8xf32>
    %22 = tpu.iota {dimensions = array<i32: 1>} : vector<8x8xi32>
    %23 = math.tanh %21 : vector<8x8xf32>
    %24 = math.exp %21 : vector<8x8xf32>
    %cst_17 = arith.constant 1.000000e-01 : f32
    %cst_18 = arith.constant 5.000000e-01 : f32
    %25 = vector.broadcast %cst_17 : f32 to vector<8x8xf32>
    %26 = arith.maximumf %25, %24 : vector<8x8xf32>
    %27 = vector.broadcast %cst_18 : f32 to vector<8x8xf32>
    %28 = arith.minimumf %27, %26 : vector<8x8xf32>
    %c4_i32 = arith.constant 4 : i32
    %29 = vector.broadcast %c4_i32 : i32 to vector<8x8xi32>
    %30 = arith.cmpi slt, %22, %29 : vector<8x8xi32>
    %31 = arith.select %30, %23, %28 : vector<8x8xi1>, vector<8x8xf32>
    %c0_19 = arith.constant 0 : index
    %c0_20 = arith.constant 0 : index
    %32 = vector.load %arg8[%c0_19, %c0_20] : memref<8x8xf32, #tpu.memory_space<vmem>>, vector<8x8xf32>
    tpu.vector_store %arg8[%c0_19, %c0_20], %31 {strides = array<i32>} : memref<8x8xf32, #tpu.memory_space<vmem>>, vector<8x8xf32>,
    return
  }
  func.func @transform_0(%arg0: i32) -> (i32, i32) {
    %c0_i32 = arith.constant 0 : i32
    %c0_i32_0 = arith.constant 0 : i32
    return %arg0, %c0_i32 : i32, i32
  }
  func.func @transform_1(%arg0: i32) -> (i32, i32) {
    %c0_i32 = arith.constant 0 : i32
    %c0_i32_0 = arith.constant 0 : i32
    %c0_i32_1 = arith.constant 0 : i32
    return %c0_i32, %c0_i32_0 : i32, i32
  }
  func.func @transform_2(%arg0: i32) -> (i32, i32) {
    %c0_i32 = arith.constant 0 : i32
    %c0_i32_0 = arith.constant 0 : i32
    %c0_i32_1 = arith.constant 0 : i32
    return %c0_i32, %c0_i32_0 : i32, i32
  }
  func.func @transform_3(%arg0: i32) -> (i32, i32) {
    %c0_i32 = arith.constant 0 : i32
    %c0_i32_0 = arith.constant 0 : i32
    %c0_i32_1 = arith.constant 0 : i32
    return %c0_i32, %c0_i32_0 : i32, i32
  }
  func.func @transform_4(%arg0: i32) -> (i32, i32) {
    %c0_i32 = arith.constant 0 : i32
    %c0_i32_0 = arith.constant 0 : i32
    %c0_i32_1 = arith.constant 0 : i32
    return %c0_i32, %c0_i32_0 : i32, i32
  }
  func.func @transform_5(%arg0: i32) -> (i32, i32) {
    %c0_i32 = arith.constant 0 : i32
    %c0_i32_0 = arith.constant 0 : i32
    %c0_i32_1 = arith.constant 0 : i32
    return %c0_i32, %c0_i32_0 : i32, i32
  }
  func.func @transform_6(%arg0: i32) -> (i32, i32) {
    %c0_i32 = arith.constant 0 : i32
    %c0_i32_0 = arith.constant 0 : i32
    %c0_i32_1 = arith.constant 0 : i32
    return %c0_i32, %c0_i32_0 : i32, i32
  }
  func.func @transform_7(%arg0: i32) -> (i32, i32) {
    %c0_i32 = arith.constant 0 : i32
    %c0_i32_0 = arith.constant 0 : i32
    return %arg0, %c0_i32 : i32, i32
  }
}

</mosaic_0001>

<llo_original>
// kernel: tpu_custom_call.1
$region0: #{tpu_custom_call.1}
  #allocation0 [shape = 'u32[]', space=smem, size = 0x4, offset = 0x4, fixed_abs, tag = 'smem constant byte address 0x4 - core index']
  #allocation1 [shape = 'u32[72,128]{1,0:T(1,128)}', space=vmem, size = 0x9000, scoped, tag = 'internal scratch']
  %s0 = inlined_call_operand.vmem [shape: bf16[8,16], index: 0, kind: input, shape index: {}]
  %s1 = inlined_call_operand.hbm [shape: bf16[16,32], index: 1, kind: input, shape index: {}]
  %s2 = inlined_call_operand.hbm [shape: f32[1,32], index: 2, kind: input, shape index: {}]
  %s3 = inlined_call_operand.vmem [shape: bf16[32,32], index: 3, kind: input, shape index: {}]
  %s4 = inlined_call_operand.hbm [shape: f32[1,32], index: 4, kind: input, shape index: {}]
  %s5 = inlined_call_operand.vmem [shape: bf16[32,8], index: 5, kind: input, shape index: {}]
  %s6 = inlined_call_operand.vmem [shape: f32[1,8], index: 6, kind: input, shape index: {}]
  %s7 = inlined_call_operand.hbm [shape: f32[8,8], index: 7, kind: output, shape index: {}]
  %s8 = sld [smem:[#allocation0]]
  $region50: #{tpu_custom_call.1} parent=0
    _
  %s10 = ssub.s32 1, %s8
  %s11 = scalar_select 0, %s10, %s8
  $region1: #{tpu_custom_call.1} parent=0
    #allocation2 [shape = 'u8[4096]{0}', space=vmem, size = 0x1000, scoped, tag = 'input window, operand 1, single buffered']
    #allocation3 [shape = 's32[1]{0}', space=sflag, size = 0x4, scoped, tag = 'scoped memory for tpu_custom_call.1']
    #allocation4 [shape = 's32[1]{0}', space=sflag, size = 0x4, scoped, tag = 'scoped memory for tpu_custom_call.1']
    #allocation5 [shape = 'u8[512]{0}', space=vmem, size = 0x400, scoped, tag = 'input window, operand 2, single buffered']
    #allocation6 [shape = 's32[1]{0}', space=sflag, size = 0x4, scoped, tag = 'scoped memory for tpu_custom_call.1']
    #allocation7 [shape = 'u8[512]{0}', space=vmem, size = 0x400, scoped, tag = 'input window, operand 4, single buffered']
    #allocation8 [shape = 'u8[4096]{0}', space=vmem, size = 0x1000, scoped, tag = 'output window, operand 0, single buffered']
    %12 = vsyncpa [#allocation3], 0
    %13 = vsyncpa [#allocation6], 0
    %14 = vsyncpa [#allocation4], 0
    // Predicated region
    $region2: #{tpu_custom_call.1} parent=1 // pred_check
      _
    $region3: #{tpu_custom_call.1} parent=1 // pred_check_branch
      %16 = sbr.rel (0) target = $region5
    $region4: #{tpu_custom_call.1} parent=1 // pred_region
      _
    $region5: #{tpu_custom_call.1} parent=1 // pred_fallthru
      _
    // Predicated region
    $region6: #{tpu_custom_call.1} parent=1 // pred_check
      _
    $region7: #{tpu_custom_call.1} parent=1 // pred_check_branch
      %18 = sbr.rel (0) target = $region9
    $region8: #{tpu_custom_call.1} parent=1 // pred_region
      %20 = vsyncadd [#allocation3], 0
      %s21 = sshll.u32 %s1, 4
      %s22 = int_to_ptr.hbm [resolvable:$true] %s21
      %s23 = sshll.u32 [#allocation2], 4
      %s24 = int_to_ptr.vmem [resolvable:$true] %s23
      %29 = dma.hbm_to_vmem [thread:$0]  %s22, 128, %s24, [#allocation3], 64, 64, 4
    $region9: #{tpu_custom_call.1} parent=1 // pred_fallthru
      _
    // Predicated region
    $region10: #{tpu_custom_call.1} parent=1 // pred_check
      _
    $region11: #{tpu_custom_call.1} parent=1 // pred_check_branch
      %31 = sbr.rel (0) target = $region13
    $region12: #{tpu_custom_call.1} parent=1 // pred_region
      %33 = vsyncadd [#allocation6], 0
      %s35 = sshll.u32 %s2, 4
      %s36 = int_to_ptr.hbm [resolvable:$true] %s35
      %s37 = sshll.u32 [#allocation5], 4
      %s38 = int_to_ptr.vmem [resolvable:$true] %s37
      %40 = dma.hbm_to_vmem [thread:$0]  %s36, 16, %s38, [#allocation6]
    $region13: #{tpu_custom_call.1} parent=1 // pred_fallthru
      _
    // Predicated region
    $region14: #{tpu_custom_call.1} parent=1 // pred_check
      _
    $region15: #{tpu_custom_call.1} parent=1 // pred_check_branch
      %42 = sbr.rel (0) target = $region17
    $region16: #{tpu_custom_call.1} parent=1 // pred_region
      _
    $region17: #{tpu_custom_call.1} parent=1 // pred_fallthru
      _
    // Predicated region
    $region18: #{tpu_custom_call.1} parent=1 // pred_check
      _
    $region19: #{tpu_custom_call.1} parent=1 // pred_check_branch
      %44 = sbr.rel (0) target = $region21
    $region20: #{tpu_custom_call.1} parent=1 // pred_region
      %46 = vsyncadd [#allocation6], 0
      %s48 = sshll.u32 %s4, 4
      %s49 = int_to_ptr.hbm [resolvable:$true] %s48
      %s50 = sshll.u32 [#allocation7], 4
      %s51 = int_to_ptr.vmem [resolvable:$true] %s50
      %53 = dma.hbm_to_vmem [thread:$0]  %s49, 16, %s51, [#allocation6]
    $region21: #{tpu_custom_call.1} parent=1 // pred_fallthru
      _
    // Predicated region
    $region22: #{tpu_custom_call.1} parent=1 // pred_check
      _
    $region23: #{tpu_custom_call.1} parent=1 // pred_check_branch
      %55 = sbr.rel (0) target = $region25
    $region24: #{tpu_custom_call.1} parent=1 // pred_region
      _
    $region25: #{tpu_custom_call.1} parent=1 // pred_fallthru
      _
    // Predicated region
    $region26: #{tpu_custom_call.1} parent=1 // pred_check
      _
    $region27: #{tpu_custom_call.1} parent=1 // pred_check_branch
      %57 = sbr.rel (0) target = $region29
    $region28: #{tpu_custom_call.1} parent=1 // pred_region
      _
    $region29: #{tpu_custom_call.1} parent=1 // pred_fallthru
      _
    // Predicated region
    $region30: #{tpu_custom_call.1} parent=1 // pred_check
      _
    $region31: #{tpu_custom_call.1} parent=1 // pred_check_branch
      %59 = sbr.rel (0) target = $region33
    $region32: #{tpu_custom_call.1} parent=1 // pred_region
      %61 = dma.done [#allocation3], 128
    $region33: #{tpu_custom_call.1} parent=1 // pred_fallthru
      _
    // Predicated region
    $region34: #{tpu_custom_call.1} parent=1 // pred_check
      _
    $region35: #{tpu_custom_call.1} parent=1 // pred_check_branch
      %63 = sbr.rel (0) target = $region37
    $region36: #{tpu_custom_call.1} parent=1 // pred_region
      %65 = dma.done [#allocation6], 16
    $region37: #{tpu_custom_call.1} parent=1 // pred_fallthru
      _
    // Predicated region
    $region38: #{tpu_custom_call.1} parent=1 // pred_check
      _
    $region39: #{tpu_custom_call.1} parent=1 // pred_check_branch
      %67 = sbr.rel (0) target = $region41
    $region40: #{tpu_custom_call.1} parent=1 // pred_region
      %69 = dma.done [#allocation6], 16
    $region41: #{tpu_custom_call.1} parent=1 // pred_fallthru
      _
    %v71 = vld [vmem:[%s0] sm:$0xf]
    %v72 = vld [vmem:[#allocation2] sm:$0xf]
    %v73 = vld [vmem:[#allocation2 + $0x4] sm:$0xf]
    %v74 = vld [vmem:[#allocation5] sm:$0x1]
    %v76 = vperm.slane %v74, 0
    %v80 = vunpack.c.l.b16 %v72
    %v81 = vunpack.c.l.b16 %v73
    %v82 = vpack.c.b16 %v81, %v80
    %vm84 = vcmask 130048
    %v86 = vsel %vm84, %v71, 0
    %88 = vmatpush.bf16.msra.mxu0 0
    %89 = vmatpush.bf16.msra.mxu0 0
    %90 = vmatpush.bf16.msra.mxu0 0
    %91 = vmatpush.bf16.msra.mxu0 0
    %92 = vmatpush.bf16.msra.mxu0 0
    %93 = vmatpush.bf16.msra.mxu0 0
    %94 = vmatpush.bf16.msra.mxu0 0
    %95 = vmatpush.bf16.msra.mxu0 %v82
    %96 = vmatmul.bf16.gmra.mxu0 %v86
    %v97 = vpop.f32.mrf.mxu0
    %v98 = vadd.f32 %v76, %v97
    %v99 = vpop.f32.mrf.mxu0
    %100 = vdwg.mxu0
    %v101 = vmax.f32 %v98, 0.0
    %v102 = vpack.c.bf16 %v101, %v101
    %v103 = vld [vmem:[%s3] sm:$0xf]
    %v104 = vld [vmem:[%s3 + $0x4] sm:$0xf]
    %v105 = vld [vmem:[%s3 + $0x8] sm:$0xf]
    %v106 = vld [vmem:[%s3 + $0xc] sm:$0xf]
    %v107 = vld [vmem:[#allocation7] sm:$0x1]
    %v109 = vperm.slane %v107, 0
    %v115 = vunpack.c.l.b16 %v103
    %v116 = vunpack.c.l.b16 %v104
    %v117 = vunpack.c.l.b16 %v105
    %v118 = vunpack.c.l.b16 %v106
    %v119 = vpack.c.b16 %v116, %v115
    %v120 = vpack.c.b16 %v118, %v117
    %vm123 = vcmask 261120
    %v125 = vsel %vm123, %v102, 0
    %127 = vmatpush.bf16.msra.mxu0 0
    %128 = vmatpush.bf16.msra.mxu0 0
    %129 = vmatpush.bf16.msra.mxu0 0
    %130 = vmatpush.bf16.msra.mxu0 0
    %131 = vmatpush.bf16.msra.mxu0 0
    %132 = vmatpush.bf16.msra.mxu0 0
    %133 = vmatpush.bf16.msra.mxu0 %v120
    %134 = vmatpush.bf16.msra.mxu0 %v119
    %135 = vmatmul.bf16.gmra.mxu0 %v125
    %v136 = vpop.f32.mrf.mxu0
    %v137 = vadd.f32 %v109, %v136
    %v138 = vpop.f32.mrf.mxu0
    %139 = vdwg.mxu0
    %v140 = vmax.f32 %v137, 0.0
    %v141 = vpack.c.bf16 %v140, %v140
    %v142 = vld [vmem:[%s5] sm:$0xf]
    %v143 = vld [vmem:[%s5 + $0x4] sm:$0xf]
    %v144 = vld [vmem:[%s5 + $0x8] sm:$0xf]
    %v145 = vld [vmem:[%s5 + $0xc] sm:$0xf]
    %v146 = vld [vmem:[%s6] sm:$0x1]
    %v148 = vperm.slane %v146, 0
    %v154 = vunpack.c.l.b16 %v142
    %v155 = vunpack.c.l.b16 %v143
    %v156 = vunpack.c.l.b16 %v144
    %v157 = vunpack.c.l.b16 %v145
    %v158 = vpack.c.b16 %v155, %v154
    %v159 = vpack.c.b16 %v157, %v156
    %v163 = vsel %vm123, %v141, 0
    %165 = vmatpush.bf16.msra.mxu0 0
    %166 = vmatpush.bf16.msra.mxu0 0
    %167 = vmatpush.bf16.msra.mxu0 0
    %168 = vmatpush.bf16.msra.mxu0 0
    %169 = vmatpush.bf16.msra.mxu0 0
    %170 = vmatpush.bf16.msra.mxu0 0
    %171 = vmatpush.bf16.msra.mxu0 %v159
    %172 = vmatpush.bf16.msra.mxu0 %v158
    %173 = vmatmul.bf16.gmra.mxu0 %v163
    %v174 = vpop.f32.mrf.mxu0
    %v175 = vadd.f32 %v148, %v174
    %v176 = vpop.f32.mrf.mxu0
    %177 = vdwg.mxu0
    %v178 = vlaneseq
    %v179 = vand.u32 %v178, 127
    %v180 = vtanh.pop %v175
    %v181 = vmul.f32 %v175, 1.442695
    %v182 = vpow.pop %v181
    %v183 = vmax.f32 %v182, 0.1
    %v184 = vmin.f32 %v183, 0.5
    %vm185 = vcmp.lt.s32.totalorder %v179, 4
    %v186 = vsel %vm185, %v180, %v184
    %vm187 = vcmask 64512
    %188 = vst.msk [vmem:[#allocation8] sm:$0xff] %vm187, %v186
    // Predicated region
    $region42: #{tpu_custom_call.1} parent=1 // pred_check
      _
    $region43: #{tpu_custom_call.1} parent=1 // pred_check_branch
      %190 = sbr.rel (0) target = $region45
    $region44: #{tpu_custom_call.1} parent=1 // pred_region
      %192 = vsyncadd [#allocation4], 0
      %s194 = sshll.u32 [#allocation8], 4
      %s195 = int_to_ptr.vmem [resolvable:$true] %s194
      %s196 = sshll.u32 %s7, 4
      %s197 = int_to_ptr.hbm [resolvable:$true] %s196
      %199 = dma.vmem_to_hbm [thread:$0]  %s195, 128, %s197, [#allocation4]
    $region45: #{tpu_custom_call.1} parent=1 // pred_fallthru
      _
    // Predicated region
    $region46: #{tpu_custom_call.1} parent=1 // pred_check
      _
    $region47: #{tpu_custom_call.1} parent=1 // pred_check_branch
      %201 = sbr.rel (0) target = $region49
    $region48: #{tpu_custom_call.1} parent=1 // pred_region
      %203 = dma.done [#allocation4], 128
    $region49: #{tpu_custom_call.1} parent=1 // pred_fallthru
      _
    %204 = vsyncpa [#allocation3], 1
    %205 = vsyncpa [#allocation6], 1
    %206 = vsyncpa [#allocation4], 1

</llo_original>
